<compile_context>
chip_gen: v7x
topology: tpu7x:2x2x1
jax: 0.10.0
libtpu: 0.0.40
codegen_flags: <defaults>
</compile_context>

<pallas_src>
import functools

import jax
import jax.numpy as jnp
from jax.experimental import pallas as pl
from jax.experimental.pallas import tpu as pltpu

# Module "globals" (RPIX, CPIX, PARAMS.nchannels) -- small synthetic values.
RPIX = 16
CPIX = 16
NCHANNELS = 4
HIDDEN = 32
KH = KW = 3
LANE = 128


def _round_up(x, m):
    return ((x + m - 1) // m) * m


def _cloudmask_kernel(xcolt_ref, gt_ref, w1t_ref, b1_ref, w2_ref, b2_ref,
                      out_ref, part_ref, *, m_total):
    """One M-tile per grid step (pixels on lanes).

    xcolt_ref : (KKC_PAD, TILE_M) bf16  im2col patches, transposed (pixels on lanes)
    gt_ref    : (1, TILE_M)       f32   BCE targets, lane-dense
    w1t_ref   : (HIDDEN, KKC_PAD) bf16  conv3x3-as-matmul weights (transposed)
    b1_ref    : (HIDDEN, 1)       f32
    w2_ref    : (HIDDEN, 1)       f32   1x1 conv head
    b2_ref    : (1, 1)            f32
    out_ref   : (1, TILE_M)       f32   sigmoid probabilities (lane-dense)
    part_ref  : (1, 1, LANE)      f32   per-tile BCE partial sum (scalar broadcast)
    """
    tile_m = out_ref.shape[-1]

    # conv3x3 (im2col matmul) on the MXU; output keeps pixels on lanes: (HIDDEN, TILE_M)
    h = jnp.dot(w1t_ref[...], xcolt_ref[...],
                preferred_element_type=jnp.float32)
    h = jnp.maximum(h + b1_ref[...], 0.0)                       # bias broadcast along lanes

    # 1x1 conv head as a sublane reduction (avoids an MXU matmul with output width 1)
    z = jnp.sum(h * w2_ref[...], axis=0, keepdims=True) + b2_ref[...]   # (1, TILE_M)

    # sigmoid probabilities (EUP exp + approx reciprocal)
    p = pl.reciprocal(1.0 + jnp.exp(-z), approx=True)
    out_ref[...] = p.astype(out_ref.dtype)

    # Numerically-stable BCE from logits; identical to nn.BCELoss(sigmoid(z), y)
    # for any practical |z| (differences only beyond the |z|>100 clamp region).
    y = gt_ref[...]
    bce = jnp.maximum(z, 0.0) - z * y + jnp.log(1.0 + jnp.exp(-jnp.abs(z)))

    # Mask out padded pixel columns of the last tile.
    col = (jax.lax.broadcasted_iota(jnp.int32, (1, tile_m), 1)
           + pl.program_id(0) * tile_m)
    bce = jnp.where(col < m_total, bce, 0.0)

    part_ref[...] = jnp.broadcast_to(jnp.sum(bce), part_ref.shape).astype(jnp.float32)


def _im2col_nhwc(x_nhwc, kh=KH, kw=KW):
    """(N, H, W, C) -> (N, H*W, kh*kw*C), 'same' padding of 1.  Pure layout glue."""
    n, h, w, c = x_nhwc.shape
    xp = jnp.pad(x_nhwc, ((0, 0), (1, 1), (1, 1), (0, 0)))
    cols = []
    for dh in range(kh):
        for dw in range(kw):
            cols.append(xp[:, dh:dh + h, dw:dw + w, :])
    xcol = jnp.concatenate(cols, axis=-1)                        # (N, H, W, kh*kw*C)
    return xcol.reshape(n, h * w, kh * kw * c)


@functools.partial(jax.jit, static_argnames=("tile_m",))
def cloud_mask_base_forward(x_nchw, gt_nchw, w1, b1, w2, b2, *, tile_m=512):
    """Equivalent of CloudMaskBase.forward(x, gt) -> (out, loss)."""
    n, c, h, w = x_nchw.shape
    hw = h * w
    m = n * hw                                # flattened batch*pixels
    kkc = KH * KW * c
    kkc_pad = _round_up(kkc, 16)              # bf16-sublane-friendly contraction width
    m_pad = _round_up(m, tile_m)
    grid = m_pad // tile_m

    # ---------------- layout glue (outside the kernel) ----------------
    x_nhwc = jnp.transpose(x_nchw, (0, 2, 3, 1)).astype(jnp.float32)
    xcol = _im2col_nhwc(x_nhwc).reshape(m, kkc)                          # (M, KKC)
    xcol = jnp.pad(xcol, ((0, m_pad - m), (0, kkc_pad - kkc)))
    xcol_t = xcol.T.astype(jnp.bfloat16)                                 # (KKC_PAD, M_pad)

    gt_row = jnp.pad(gt_nchw.reshape(m).astype(jnp.float32), (0, m_pad - m))
    gt_row = gt_row.reshape(1, m_pad)                                    # lane-dense targets

    w1t = jnp.pad(w1.reshape(kkc, HIDDEN).astype(jnp.float32),
                  ((0, kkc_pad - kkc), (0, 0))).T.astype(jnp.bfloat16)   # (HIDDEN, KKC_PAD)
    b1_col = b1.reshape(HIDDEN, 1).astype(jnp.float32)
    w2_col = w2.reshape(HIDDEN, 1).astype(jnp.float32)
    b2_11 = b2.reshape(1, 1).astype(jnp.float32)

    kernel = functools.partial(_cloudmask_kernel, m_total=m)

    out_row, partials = pl.pallas_call(
        kernel,
        out_shape=(
            jax.ShapeDtypeStruct((1, m_pad), jnp.float32),
            jax.ShapeDtypeStruct((grid, 1, LANE), jnp.float32),
        ),
        grid_spec=pltpu.PrefetchScalarGridSpec(
            num_scalar_prefetch=0,
            grid=(grid,),
            in_specs=[
                pl.BlockSpec((kkc_pad, tile_m), lambda i: (0, i)),
                pl.BlockSpec((1, tile_m), lambda i: (0, i)),
                pl.BlockSpec((HIDDEN, kkc_pad), lambda i: (0, 0)),
                pl.BlockSpec((HIDDEN, 1), lambda i: (0, 0)),
                pl.BlockSpec((HIDDEN, 1), lambda i: (0, 0)),
                pl.BlockSpec((1, 1), lambda i: (0, 0)),
            ],
            out_specs=[
                pl.BlockSpec((1, tile_m), lambda i: (0, i)),
                pl.BlockSpec((1, 1, LANE), lambda i: (i, 0, 0)),
            ],
        ),
        compiler_params=pltpu.CompilerParams(
            dimension_semantics=("parallel",),   # per-tile partials -> grid can shard on v7x
        ),
    )(xcol_t, gt_row, w1t, b1_col, w2_col, b2_11)

    out = out_row[0, :m].reshape(n, 1, h, w)           # back to NCHW, like torch
    loss = jnp.sum(partials[:, 0, 0]) / m              # nn.BCELoss mean reduction
    return out, loss


def _reference_forward(x_nchw, gt_nchw, w1, b1, w2, b2):
    """Pure-JAX f32 reference mirroring the PyTorch module semantics."""
    n, c, h, w = x_nchw.shape
    kkc = KH * KW * c
    x_nhwc = jnp.transpose(x_nchw, (0, 2, 3, 1)).astype(jnp.float32)
    xcol = _im2col_nhwc(x_nhwc)                                          # (N, HW, KKC)
    hh = jnp.maximum(xcol @ w1.reshape(kkc, HIDDEN) + b1.reshape(1, HIDDEN), 0.0)
    logits = hh @ w2.reshape(HIDDEN, 1) + b2.reshape(1, 1)
    p = jax.nn.sigmoid(logits)                                           # (N, HW, 1)
    out = p.reshape(n, h, w)[:, None, :, :]
    gt = gt_nchw.astype(jnp.float32)
    log_p = jnp.maximum(jnp.log(out), -100.0)
    log_1mp = jnp.maximum(jnp.log(1.0 - out), -100.0)
    loss = jnp.mean(-(gt * log_p + (1.0 - gt) * log_1mp))
    return out, loss


if __name__ == "__main__":
    key = jax.random.PRNGKey(0)
    k_x, k_gt, k_w1, k_b1, k_w2, k_b2 = jax.random.split(key, 6)

    # N=3 -> M = 768, padded to 1024 with TILE_M=512: exercises a 2-step parallel grid
    # plus the padded-column masking path.
    N = 3
    x = jax.random.normal(k_x, (N, NCHANNELS, RPIX, CPIX), dtype=jnp.float32)
    gt = jax.random.bernoulli(k_gt, 0.5, (N, 1, RPIX, CPIX)).astype(jnp.float32)

    # Deterministic synthetic parameters (shapes implied by the conv head).
    w1 = 0.1 * jax.random.normal(k_w1, (KH, KW, NCHANNELS, HIDDEN), dtype=jnp.float32)
    b1 = 0.01 * jax.random.normal(k_b1, (HIDDEN,), dtype=jnp.float32)
    w2 = 0.1 * jax.random.normal(k_w2, (HIDDEN, 1), dtype=jnp.float32)
    b2 = 0.01 * jax.random.normal(k_b2, (1,), dtype=jnp.float32)

    out, loss = cloud_mask_base_forward(x, gt, w1, b1, w2, b2)
    out = jax.block_until_ready(out)
    loss = jax.block_until_ready(loss)

    ref_out, ref_loss = _reference_forward(x, gt, w1, b1, w2, b2)
    assert out.shape == (N, 1, RPIX, CPIX)
    # Matmul operands are bf16 in the kernel (f32 accumulate) -> slightly looser tol.
    assert jnp.allclose(out, ref_out, rtol=5e-3, atol=5e-3)
    assert jnp.allclose(loss, ref_loss, rtol=5e-3, atol=5e-3)
    assert bool(jnp.isfinite(loss))

    print("KERNEL_OK")
</pallas_src>

<mosaic_0001>
module attributes {stable_mosaic.version = 11 : i64} {
  func.func @_cloudmask_kernel(%arg0: i32, %arg1: memref<48x512xbf16, #tpu.memory_space<vmem>>, %arg2: memref<1x512xf32, #tpu.memory_space<vmem>>, %arg3: memref<32x48xbf16, #tpu.memory_space<vmem>>, %arg4: memref<32x1xf32, #tpu.memory_space<vmem>>, %arg5: memref<32x1xf32, #tpu.memory_space<vmem>>, %arg6: memref<1x1xf32, #tpu.memory_space<vmem>>, %arg7: memref<1x512xf32, #tpu.memory_space<vmem>>, %arg8: memref<1x1x128xf32, #tpu.memory_space<vmem>>) attributes {dimension_semantics = [#tpu.dimension_semantics<parallel>], iteration_bounds = array<i64: 2>, scalar_prefetch = 0 : i64, scratch_operands = 0 : i64, tpu.core_type = #tpu.core_type<tc>, window_params = [{transform_indices = @transform_0, window_bounds = array<i64: 48, 512>}, {transform_indices = @transform_1, window_bounds = array<i64: 1, 512>}, {pipeline_mode = #tpu.pipeline_mode<synchronous>, transform_indices = @transform_2, window_bounds = array<i64: 32, 48>}, {pipeline_mode = #tpu.pipeline_mode<synchronous>, transform_indices = @transform_3, window_bounds = array<i64: 32, 1>}, {pipeline_mode = #tpu.pipeline_mode<synchronous>, transform_indices = @transform_4, window_bounds = array<i64: 32, 1>}, {pipeline_mode = #tpu.pipeline_mode<synchronous>, transform_indices = @transform_5, window_bounds = array<i64: 1, 1>}, {transform_indices = @transform_6, window_bounds = array<i64: 1, 512>}, {transform_indices = @transform_7, window_bounds = array<i64: 1, 1, 128>}]} {
    %c0 = arith.constant 0 : index
    %c0_0 = arith.constant 0 : index
    %0 = vector.load %arg3[%c0, %c0_0] : memref<32x48xbf16, #tpu.memory_space<vmem>>, vector<32x48xbf16>
    %c0_1 = arith.constant 0 : index
    %c0_2 = arith.constant 0 : index
    %1 = vector.load %arg1[%c0_1, %c0_2] : memref<48x512xbf16, #tpu.memory_space<vmem>>, vector<48x512xbf16>
    %cst = arith.constant dense<0.000000e+00> : vector<32x512xf32>
    %2 = tpu.matmul %0, %1, %cst {dimension_numbers = #tpu.dot_dimension_numbers<[1], [0], [0], [1], [0, 0, 1, 1], [], []>} : vector<32x48xbf16>, vector<48x512xbf16>, vector<32x512xf32> -> vector<32x512xf32>
    %c0_3 = arith.constant 0 : index
    %c0_4 = arith.constant 0 : index
    %3 = vector.load %arg4[%c0_3, %c0_4] : memref<32x1xf32, #tpu.memory_space<vmem>>, vector<32x1xf32>
    %4 = vector.broadcast %3 : vector<32x1xf32> to vector<32x512xf32>
    %5 = arith.addf %2, %4 : vector<32x512xf32>
    %cst_5 = arith.constant 0.000000e+00 : f32
    %6 = vector.broadcast %cst_5 : f32 to vector<32x512xf32>
    %7 = arith.maximumf %5, %6 : vector<32x512xf32>
    %c0_6 = arith.constant 0 : index
    %c0_7 = arith.constant 0 : index
    %8 = vector.load %arg5[%c0_6, %c0_7] : memref<32x1xf32, #tpu.memory_space<vmem>>, vector<32x1xf32>
    %9 = vector.broadcast %8 : vector<32x1xf32> to vector<32x512xf32>
    %10 = arith.mulf %7, %9 : vector<32x512xf32>
    %cst_8 = arith.constant dense<0.000000e+00> : vector<512xf32>
    %11 = vector.multi_reduction <add>, %10, %cst_8 [0] : vector<32x512xf32> to vector<512xf32>
    %12 = vector.shape_cast %11 : vector<512xf32> to vector<1x512xf32>
    %c0_9 = arith.constant 0 : index
    %c0_10 = arith.constant 0 : index
    %13 = vector.load %arg6[%c0_9, %c0_10] : memref<1x1xf32, #tpu.memory_space<vmem>>, vector<1x1xf32>
    %14 = vector.broadcast %13 : vector<1x1xf32> to vector<1x512xf32>
    %15 = arith.addf %12, %14 : vector<1x512xf32>
    %cst_11 = arith.constant 0.000000e+00 : f32
    %16 = vector.broadcast %cst_11 : f32 to vector<1x512xf32>
    %17 = arith.subf %16, %15 : vector<1x512xf32>
    %18 = math.exp %17 : vector<1x512xf32>
    %cst_12 = arith.constant 1.000000e+00 : f32
    %19 = vector.broadcast %cst_12 : f32 to vector<1x512xf32>
    %20 = arith.addf %19, %18 : vector<1x512xf32>
    %21 = tpu.reciprocal %20 {approx = true} : vector<1x512xf32> -> vector<1x512xf32>
    %c0_13 = arith.constant 0 : index
    %c0_14 = arith.constant 0 : index
    %22 = vector.load %arg7[%c0_13, %c0_14] : memref<1x512xf32, #tpu.memory_space<vmem>>, vector<1x512xf32>
    tpu.vector_store %arg7[%c0_13, %c0_14], %21 {strides = array<i32>} : memref<1x512xf32, #tpu.memory_space<vmem>>, vector<1x512xf32>,
    %c0_15 = arith.constant 0 : index
    %c0_16 = arith.constant 0 : index
    %23 = vector.load %arg2[%c0_15, %c0_16] : memref<1x512xf32, #tpu.memory_space<vmem>>, vector<1x512xf32>
    %cst_17 = arith.constant 0.000000e+00 : f32
    %24 = vector.broadcast %cst_17 : f32 to vector<1x512xf32>
    %25 = arith.maximumf %15, %24 : vector<1x512xf32>
    %26 = arith.mulf %15, %23 : vector<1x512xf32>
    %27 = arith.subf %25, %26 : vector<1x512xf32>
    %28 = math.absf %15 : vector<1x512xf32>
    %cst_18 = arith.constant 0.000000e+00 : f32
    %29 = vector.broadcast %cst_18 : f32 to vector<1x512xf32>
    %30 = arith.subf %29, %28 : vector<1x512xf32>
    %31 = math.exp %30 : vector<1x512xf32>
    %cst_19 = arith.constant 1.000000e+00 : f32
    %32 = vector.broadcast %cst_19 : f32 to vector<1x512xf32>
    %33 = arith.addf %32, %31 : vector<1x512xf32>
    %34 = math.log %33 : vector<1x512xf32>
    %35 = arith.addf %27, %34 : vector<1x512xf32>
    %36 = tpu.iota {dimensions = array<i32: 1>} : vector<1x512xi32>
    %c512_i32 = arith.constant 512 : i32
    %37 = arith.muli %arg0, %c512_i32 : i32
    %38 = vector.broadcast %37 : i32 to vector<1x512xi32>
    %39 = arith.addi %36, %38 : vector<1x512xi32>
    %c768_i32 = arith.constant 768 : i32
    %40 = vector.broadcast %c768_i32 : i32 to vector<1x512xi32>
    %41 = arith.cmpi slt, %39, %40 : vector<1x512xi32>
    %cst_20 = arith.constant 0.000000e+00 : f32
    %42 = vector.broadcast %cst_20 : f32 to vector<1x512xf32>
    %43 = arith.select %41, %35, %42 : vector<1x512xi1>, vector<1x512xf32>
    %44 = vector.shape_cast %43 : vector<1x512xf32> to vector<1x1x512xf32>
    %cst_21 = arith.constant dense<0.000000e+00> : vector<1xf32>
    %45 = vector.multi_reduction <add>, %44, %cst_21 [1, 2] : vector<1x1x512xf32> to vector<1xf32>
    %46 = vector.shape_cast %45 : vector<1xf32> to vector<1x1x1xf32>
    %47 = vector.extract %46[0, 0, 0] : f32 from vector<1x1x1xf32>
    %48 = vector.broadcast %47 : f32 to vector<1x1x128xf32>
    %c0_22 = arith.constant 0 : index
    %c0_23 = arith.constant 0 : index
    %c0_24 = arith.constant 0 : index
    %49 = vector.load %arg8[%c0_22, %c0_23, %c0_24] : memref<1x1x128xf32, #tpu.memory_space<vmem>>, vector<1x1x128xf32>
    tpu.vector_store %arg8[%c0_22, %c0_23, %c0_24], %48 {strides = array<i32>} : memref<1x1x128xf32, #tpu.memory_space<vmem>>, vector<1x1x128xf32>,
    return
  }
  func.func @transform_0(%arg0: i32) -> (i32, i32) {
    %c0_i32 = arith.constant 0 : i32
    %c0_i32_0 = arith.constant 0 : i32
    return %c0_i32, %arg0 : i32, i32
  }
  func.func @transform_1(%arg0: i32) -> (i32, i32) {
    %c0_i32 = arith.constant 0 : i32
    %c0_i32_0 = arith.constant 0 : i32
    return %c0_i32, %arg0 : i32, i32
  }
  func.func @transform_2(%arg0: i32) -> (i32, i32) {
    %c0_i32 = arith.constant 0 : i32
    %c0_i32_0 = arith.constant 0 : i32
    %c0_i32_1 = arith.constant 0 : i32
    return %c0_i32, %c0_i32_0 : i32, i32
  }
  func.func @transform_3(%arg0: i32) -> (i32, i32) {
    %c0_i32 = arith.constant 0 : i32
    %c0_i32_0 = arith.constant 0 : i32
    %c0_i32_1 = arith.constant 0 : i32
    return %c0_i32, %c0_i32_0 : i32, i32
  }
  func.func @transform_4(%arg0: i32) -> (i32, i32) {
    %c0_i32 = arith.constant 0 : i32
    %c0_i32_0 = arith.constant 0 : i32
    %c0_i32_1 = arith.constant 0 : i32
    return %c0_i32, %c0_i32_0 : i32, i32
  }
  func.func @transform_5(%arg0: i32) -> (i32, i32) {
    %c0_i32 = arith.constant 0 : i32
    %c0_i32_0 = arith.constant 0 : i32
    %c0_i32_1 = arith.constant 0 : i32
    return %c0_i32, %c0_i32_0 : i32, i32
  }
  func.func @transform_6(%arg0: i32) -> (i32, i32) {
    %c0_i32 = arith.constant 0 : i32
    %c0_i32_0 = arith.constant 0 : i32
    return %c0_i32, %arg0 : i32, i32
  }
  func.func @transform_7(%arg0: i32) -> (i32, i32, i32) {
    %c0_i32 = arith.constant 0 : i32
    %c0_i32_0 = arith.constant 0 : i32
    %c0_i32_1 = arith.constant 0 : i32
    return %arg0, %c0_i32, %c0_i32_0 : i32, i32, i32
  }
}

</mosaic_0001>

<llo_original>
// kernel: squeeze.2
$region0: #{squeeze.2}
  %s0 = inlined_call_operand.vmem [shape: f32[768], index: 0, kind: input, shape index: {}]
  %s1 = inlined_call_operand.hbm [shape: f32[3,1,16,16], index: 1, kind: output, shape index: {}]
  $region1: #{squeeze.2} parent=0
    #allocation0 [shape = 'u8[24576]{0}', space=vmem, size = 0x6000, scoped, tag = 'operand span for operand 1']
    #allocation1 [shape = 's32[1]{0}', space=sflag, size = 0x4, scoped, tag = 'scoped memory for squeeze.2']
    %2 = vsyncpa [#allocation1], 0
    %v3 = vld [vmem:[%s0] sm:$0x3f]
    %vm4 = vcmask 130048
    %5 = vst.msk [vmem:[#allocation0] ss:$8 sm:$0xf] %vm4, %v3
    %6 = vst.msk [vmem:[#allocation0] ss:$8 sm:$0x30] %vm4, %v3
    %v7 = vld [vmem:[%s0] sm:$0x3f]
    %8 = vrot.lane.b32.xlu0 %v7, 112
    %v9 = vpop.permute.xlu0 %8
    %vm10 = vcmask 130048
    %s11 = scalar_lea.vmem [#allocation0], 1
    %12 = vst.msk [vmem:[%s11] ss:$8 sm:$0xf] %vm10, %v9
    %s13 = scalar_lea.vmem [#allocation0], 1
    %14 = vst.msk [vmem:[%s13] ss:$8 sm:$0x30] %vm10, %v9
    %v15 = vld [vmem:[%s0] sm:$0x3f]
    %16 = vrot.lane.b32.xlu0 %v15, 96
    %v17 = vpop.permute.xlu0 %16
    %vm18 = vcmask 130048
    %s19 = scalar_lea.vmem [#allocation0], 2
    %20 = vst.msk [vmem:[%s19] ss:$8 sm:$0xf] %vm18, %v17
    %s21 = scalar_lea.vmem [#allocation0], 2
    %22 = vst.msk [vmem:[%s21] ss:$8 sm:$0x30] %vm18, %v17
    %v23 = vld [vmem:[%s0] sm:$0x3f]
    %24 = vrot.lane.b32.xlu0 %v23, 80
    %v25 = vpop.permute.xlu0 %24
    %vm26 = vcmask 130048
    %s27 = scalar_lea.vmem [#allocation0], 3
    %28 = vst.msk [vmem:[%s27] ss:$8 sm:$0xf] %vm26, %v25
    %s29 = scalar_lea.vmem [#allocation0], 3
    %30 = vst.msk [vmem:[%s29] ss:$8 sm:$0x30] %vm26, %v25
    %v31 = vld [vmem:[%s0] sm:$0x3f]
    %32 = vrot.lane.b32.xlu0 %v31, 64
    %v33 = vpop.permute.xlu0 %32
    %vm34 = vcmask 130048
    %s35 = scalar_lea.vmem [#allocation0], 4
    %36 = vst.msk [vmem:[%s35] ss:$8 sm:$0xf] %vm34, %v33
    %s37 = scalar_lea.vmem [#allocation0], 4
    %38 = vst.msk [vmem:[%s37] ss:$8 sm:$0x30] %vm34, %v33
    %v39 = vld [vmem:[%s0] sm:$0x3f]
    %40 = vrot.lane.b32.xlu0 %v39, 48
    %v41 = vpop.permute.xlu0 %40
    %vm42 = vcmask 130048
    %s43 = scalar_lea.vmem [#allocation0], 5
    %44 = vst.msk [vmem:[%s43] ss:$8 sm:$0xf] %vm42, %v41
    %s45 = scalar_lea.vmem [#allocation0], 5
    %46 = vst.msk [vmem:[%s45] ss:$8 sm:$0x30] %vm42, %v41
    %v47 = vld [vmem:[%s0] sm:$0x3f]
    %48 = vrot.lane.b32.xlu0 %v47, 32
    %v49 = vpop.permute.xlu0 %48
    %vm50 = vcmask 130048
    %s51 = scalar_lea.vmem [#allocation0], 6
    %52 = vst.msk [vmem:[%s51] ss:$8 sm:$0xf] %vm50, %v49
    %s53 = scalar_lea.vmem [#allocation0], 6
    %54 = vst.msk [vmem:[%s53] ss:$8 sm:$0x30] %vm50, %v49
    %v55 = vld [vmem:[%s0] sm:$0x3f]
    %56 = vrot.lane.b32.xlu0 %v55, 16
    %v57 = vpop.permute.xlu0 %56
    %vm58 = vcmask 130048
    %s59 = scalar_lea.vmem [#allocation0], 7
    %60 = vst.msk [vmem:[%s59] ss:$8 sm:$0xf] %vm58, %v57
    %s61 = scalar_lea.vmem [#allocation0], 7
    %62 = vst.msk [vmem:[%s61] ss:$8 sm:$0x30] %vm58, %v57
    %s64 = ssub.s32 768, 768
    %65 = vsyncadd [#allocation1], %s64
    %s67 = sshll.u32 [#allocation0], 4
    %s68 = int_to_ptr.vmem [resolvable:$true] %s67
    %70 = dma.vmem_to_hbm [thread:$0]  %s68, 768, %s1, [#allocation1]
    %71 = dma.done [#allocation1], 768
    %72 = vsyncpa [#allocation1], 1

// kernel: cloud_mask_base_forward.1
$region0: #{cloud_mask_base_forward.1}
  #allocation0 [shape = 'u32[]', space=smem, size = 0x4, offset = 0x4, fixed_abs, tag = 'smem constant byte address 0x4 - core index']
  #allocation1 [shape = 'u32[144,128]{1,0:T(1,128)}', space=vmem, size = 0x12000, scoped, tag = 'internal scratch']
  #allocation2 [shape = 'f32[1,1]{1,0:T(1,128)S(1)}', space=vmem, size = 0x200, scoped, tag = 'scoped memory for cloud_mask_base_forward.1']
  %s0 = inlined_call_operand.vmem [shape: bf16[48,1024], index: 0, kind: input, shape index: {}]
  %s1 = inlined_call_operand.vmem [shape: f32[1,1024], index: 1, kind: input, shape index: {}]
  %s2 = inlined_call_operand.vmem [shape: bf16[32,48], index: 2, kind: input, shape index: {}]
  %s3 = inlined_call_operand.vmem [shape: f32[32,1], index: 3, kind: input, shape index: {}]
  %s4 = inlined_call_operand.vmem [shape: f32[32,1], index: 4, kind: input, shape index: {}]
  %s5 = inlined_call_operand.<no memory space> [shape: f32[1,1], index: 5, kind: input, shape index: {}]
  %s6 = inlined_call_operand.vmem [shape: f32[1,1024], index: 6, kind: output, shape index: {0}]
  %s7 = inlined_call_operand.vmem [shape: f32[2,1,128], index: 7, kind: output, shape index: {1}]
  %8 = xla_tuple %s6, %s7
  %s9 = sld [smem:[#allocation0]]
  $region88: #{cloud_mask_base_forward.1} parent=0
    _
  %s11 = ssub.s32 1, %s9
  %s12 = scalar_select 0, %s11, %s9
  %v13 = vstv %s5
  %14 = vst [vmem:[#allocation2] sm:$0x1] %v13
  $region1: #{cloud_mask_base_forward.1} parent=0
    #allocation3 [shape = 'u8[98304]{0}', space=vmem, size = 0x18000, scoped, tag = 'input window, operand 0']
    loop: start=0, step=1, limit=4
    $region2: #{cloud_mask_base_forward.1} parent=1 // loop_pre_header
      _
    $region3: #{cloud_mask_base_forward.1} parent=1 // loop_header
      %s16 = sphi 0, %s20
      %p17 = scmp.ge.s32.totalorder %s16, 4
      %s26 = sphi 0, %s28
      %s29 = sphi 0, %s26
      %s30 = sphi 0, %s29
      %s46 = sphi 0, %s30
      %s52 = sphi 0, %s54
      %s55 = sphi 0, %s52
      %s56 = sphi 0, %s55
      %s72 = sphi 0, %s56
      %s76 = sphi 0, %s76
      %s78 = sphi 0, %s76
      %s79 = sphi 0, %s78
      %s93 = sphi 0, %s79
      %s97 = sphi 0, %s97
      %s99 = sphi 0, %s97
      %s100 = sphi 0, %s99
      %s114 = sphi 0, %s100
      %s118 = sphi 0, %s118
      %s120 = sphi 0, %s118
      %s121 = sphi 0, %s120
      %s135 = sphi 0, %s121
      %s139 = sphi 0, %s139
      %s141 = sphi 0, %s139
      %s142 = sphi 0, %s141
      %s156 = sphi 0, %s142
      %s162 = sphi 0, %s164
      %s165 = sphi 0, %s162
      %s166 = sphi 0, %s165
      %s182 = sphi 0, %s166
      %s188 = sphi 0, %s190
      %s191 = sphi 0, %s188
      %s192 = sphi 0, %s191
      %s208 = sphi 0, %s192
    $region4: #{cloud_mask_base_forward.1} parent=1 // loop_header_branch
      %19 = sbr.rel (%p17) target = $region8
    $region5: #{cloud_mask_base_forward.1} parent=1 // loop_body
      %s21 = ssub.s32 %s16, 1
      %s22 = ssub.s32 %s16, 2
      %s23 = sadd.s32 %s16, 1
      %s24 = ssub.s32 %s16, %s23
      %p25 = scmp.eq.s32.totalorder %s24, 0
      %s27 = sadd.s32 %s26, 1
      %s28 = scalar_select %p25, %s26, %s27
      %p31 = pneg %p25
      %p32 = scmp.eq.s32.totalorder %s16, 1
      %p33 = por %p31, %p32
      %p34 = scmp.ne.s32.totalorder %s26, %s29
      %p35 = scmp.eq.s32.totalorder %s16, 0
      %p36 = por %p34, %p35
      %p37 = scmp.ne.s32.totalorder %s26, %s29
      %p38 = scmp.eq.s32.totalorder %s21, 1
      %p39 = por %p37, %p38
      %p40 = scmp.ne.s32.totalorder %s29, %s30
      %p41 = scmp.eq.s32.totalorder %s21, 0
      %p42 = por %p40, %p41
      %p43 = scmp.ne.s32.totalorder %s29, %s30
      %p44 = scmp.eq.s32.totalorder %s22, 1
      %p45 = por %p43, %p44
      %p47 = scmp.ne.s32.totalorder %s30, %s46
      %p48 = scmp.eq.s32.totalorder %s22, 0
      %p49 = por %p47, %p48
      %s50 = ssub.s32 %s16, %s23
      %p51 = scmp.eq.s32.totalorder %s50, 0
      %s53 = sadd.s32 %s52, 1
      %s54 = scalar_select %p51, %s52, %s53
      %p57 = pneg %p51
      %p58 = scmp.eq.s32.totalorder %s16, 1
      %p59 = por %p57, %p58
      %p60 = scmp.ne.s32.totalorder %s52, %s55
      %p61 = scmp.eq.s32.totalorder %s16, 0
      %p62 = por %p60, %p61
      %p63 = scmp.ne.s32.totalorder %s52, %s55
      %p64 = scmp.eq.s32.totalorder %s21, 1
      %p65 = por %p63, %p64
      %p66 = scmp.ne.s32.totalorder %s55, %s56
      %p67 = scmp.eq.s32.totalorder %s21, 0
      %p68 = por %p66, %p67
      %p69 = scmp.ne.s32.totalorder %s55, %s56
      %p70 = scmp.eq.s32.totalorder %s22, 1
      %p71 = por %p69, %p70
      %p73 = scmp.ne.s32.totalorder %s56, %s72
      %p74 = scmp.eq.s32.totalorder %s22, 0
      %p75 = por %p73, %p74
      %s77 = sadd.s32 %s76, 1
      %p80 = scmp.eq.s32.totalorder %s16, 1
      %p81 = scmp.ne.s32.totalorder %s76, %s78
      %p82 = scmp.eq.s32.totalorder %s16, 0
      %p83 = por %p81, %p82
      %p84 = scmp.ne.s32.totalorder %s76, %s78
      %p85 = scmp.eq.s32.totalorder %s21, 1
      %p86 = por %p84, %p85
      %p87 = scmp.ne.s32.totalorder %s78, %s79
      %p88 = scmp.eq.s32.totalorder %s21, 0
      %p89 = por %p87, %p88
      %p90 = scmp.ne.s32.totalorder %s78, %s79
      %p91 = scmp.eq.s32.totalorder %s22, 1
      %p92 = por %p90, %p91
      %p94 = scmp.ne.s32.totalorder %s79, %s93
      %p95 = scmp.eq.s32.totalorder %s22, 0
      %p96 = por %p94, %p95
      %s98 = sadd.s32 %s97, 1
      %p101 = scmp.eq.s32.totalorder %s16, 1
      %p102 = scmp.ne.s32.totalorder %s97, %s99
      %p103 = scmp.eq.s32.totalorder %s16, 0
      %p104 = por %p102, %p103
      %p105 = scmp.ne.s32.totalorder %s97, %s99
      %p106 = scmp.eq.s32.totalorder %s21, 1
      %p107 = por %p105, %p106
      %p108 = scmp.ne.s32.totalorder %s99, %s100
      %p109 = scmp.eq.s32.totalorder %s21, 0
      %p110 = por %p108, %p109
      %p111 = scmp.ne.s32.totalorder %s99, %s100
      %p112 = scmp.eq.s32.totalorder %s22, 1
      %p113 = por %p111, %p112
      %p115 = scmp.ne.s32.totalorder %s100, %s114
      %p116 = scmp.eq.s32.totalorder %s22, 0
      %p117 = por %p115, %p116
      %s119 = sadd.s32 %s118, 1
      %p122 = scmp.eq.s32.totalorder %s16, 1
      %p123 = scmp.ne.s32.totalorder %s118, %s120
      %p124 = scmp.eq.s32.totalorder %s16, 0
      %p125 = por %p123, %p124
      %p126 = scmp.ne.s32.totalorder %s118, %s120
      %p127 = scmp.eq.s32.totalorder %s21, 1
      %p128 = por %p126, %p127
      %p129 = scmp.ne.s32.totalorder %s120, %s121
      %p130 = scmp.eq.s32.totalorder %s21, 0
      %p131 = por %p129, %p130
      %p132 = scmp.ne.s32.totalorder %s120, %s121
      %p133 = scmp.eq.s32.totalorder %s22, 1
      %p134 = por %p132, %p133
      %p136 = scmp.ne.s32.totalorder %s121, %s135
      %p137 = scmp.eq.s32.totalorder %s22, 0
      %p138 = por %p136, %p137
      %s140 = sadd.s32 %s139, 1
      %p143 = scmp.eq.s32.totalorder %s16, 1
      %p144 = scmp.ne.s32.totalorder %s139, %s141
      %p145 = scmp.eq.s32.totalorder %s16, 0
      %p146 = por %p144, %p145
      %p147 = scmp.ne.s32.totalorder %s139, %s141
      %p148 = scmp.eq.s32.totalorder %s21, 1
      %p149 = por %p147, %p148
      %p150 = scmp.ne.s32.totalorder %s141, %s142
      %p151 = scmp.eq.s32.totalorder %s21, 0
      %p152 = por %p150, %p151
      %p153 = scmp.ne.s32.totalorder %s141, %s142
      %p154 = scmp.eq.s32.totalorder %s22, 1
      %p155 = por %p153, %p154
      %p157 = scmp.ne.s32.totalorder %s142, %s156
      %p158 = scmp.eq.s32.totalorder %s22, 0
      %p159 = por %p157, %p158
      %s160 = ssub.s32 %s16, %s23
      %p161 = scmp.eq.s32.totalorder %s160, 0
      %s163 = sadd.s32 %s162, 1
      %s164 = scalar_select %p161, %s162, %s163
      %p167 = pneg %p161
      %p168 = scmp.eq.s32.totalorder %s16, 1
      %p169 = por %p167, %p168
      %p170 = scmp.ne.s32.totalorder %s162, %s165
      %p171 = scmp.eq.s32.totalorder %s16, 0
      %p172 = por %p170, %p171
      %p173 = scmp.ne.s32.totalorder %s162, %s165
      %p174 = scmp.eq.s32.totalorder %s21, 1
      %p175 = por %p173, %p174
      %p176 = scmp.ne.s32.totalorder %s165, %s166
      %p177 = scmp.eq.s32.totalorder %s21, 0
      %p178 = por %p176, %p177
      %p179 = scmp.ne.s32.totalorder %s165, %s166
      %p180 = scmp.eq.s32.totalorder %s22, 1
      %p181 = por %p179, %p180
      %p183 = scmp.ne.s32.totalorder %s166, %s182
      %p184 = scmp.eq.s32.totalorder %s22, 0
      %p185 = por %p183, %p184
      %s186 = ssub.s32 %s16, %s23
      %p187 = scmp.eq.s32.totalorder %s186, 0
      %s189 = sadd.s32 %s188, 1
      %s190 = scalar_select %p187, %s188, %s189
      %p193 = pneg %p187
      %p194 = scmp.eq.s32.totalorder %s16, 1
      %p195 = por %p193, %p194
      %p196 = scmp.ne.s32.totalorder %s188, %s191
      %p197 = scmp.eq.s32.totalorder %s16, 0
      %p198 = por %p196, %p197
      %p199 = scmp.ne.s32.totalorder %s188, %s191
      %p200 = scmp.eq.s32.totalorder %s21, 1
      %p201 = por %p199, %p200
      %p202 = scmp.ne.s32.totalorder %s191, %s192
      %p203 = scmp.eq.s32.totalorder %s21, 0
      %p204 = por %p202, %p203
      %p205 = scmp.ne.s32.totalorder %s191, %s192
      %p206 = scmp.eq.s32.totalorder %s22, 1
      %p207 = por %p205, %p206
      %p209 = scmp.ne.s32.totalorder %s192, %s208
      %p210 = scmp.eq.s32.totalorder %s22, 0
      %p211 = por %p209, %p210
      %p212 = scmp.le.s32.totalorder 1, %s16
      %p213 = scmp.lt.s32.totalorder %s16, 3
      %p214 = pnand %p212, %p213
      %p215 = pneg %p214
      // Predicated region
      $region9: #{cloud_mask_base_forward.1} parent=5 // pred_check
        _
      $region10: #{cloud_mask_base_forward.1} parent=5 // pred_check_branch
        %217 = sbr.rel (%p214) target = $region12
      $region11: #{cloud_mask_base_forward.1} parent=5 // pred_region
        %s218 = ssub.s32 %s16, 1
        // Predicated region
        $region13: #{cloud_mask_base_forward.1} parent=11 // pred_check
          %p219 = pneg %p89
        $region14: #{cloud_mask_base_forward.1} parent=11 // pred_check_branch
          %221 = sbr.rel (%p219) target = $region16
        $region15: #{cloud_mask_base_forward.1} parent=11 // pred_region
          _
        $region16: #{cloud_mask_base_forward.1} parent=11 // pred_fallthru
          _
        // Predicated region
        $region17: #{cloud_mask_base_forward.1} parent=11 // pred_check
          %p222 = pneg %p110
        $region18: #{cloud_mask_base_forward.1} parent=11 // pred_check_branch
          %224 = sbr.rel (%p222) target = $region20
        $region19: #{cloud_mask_base_forward.1} parent=11 // pred_region
          _
        $region20: #{cloud_mask_base_forward.1} parent=11 // pred_fallthru
          _
        // Predicated region
        $region21: #{cloud_mask_base_forward.1} parent=11 // pred_check
          %p225 = pneg %p131
        $region22: #{cloud_mask_base_forward.1} parent=11 // pred_check_branch
          %227 = sbr.rel (%p225) target = $region24
        $region23: #{cloud_mask_base_forward.1} parent=11 // pred_region
          _
        $region24: #{cloud_mask_base_forward.1} parent=11 // pred_fallthru
          _
        // Predicated region
        $region25: #{cloud_mask_base_forward.1} parent=11 // pred_check
          %p228 = pneg %p152
        $region26: #{cloud_mask_base_forward.1} parent=11 // pred_check_branch
          %230 = sbr.rel (%p228) target = $region28
        $region27: #{cloud_mask_base_forward.1} parent=11 // pred_region
          _
        $region28: #{cloud_mask_base_forward.1} parent=11 // pred_fallthru
          _
      $region12: #{cloud_mask_base_forward.1} parent=5 // pred_fallthru
        _
      %p231 = scmp.lt.s32.totalorder %s16, 2
      // Predicated region
      $region29: #{cloud_mask_base_forward.1} parent=5 // pred_check
        %p232 = pneg %p231
      $region30: #{cloud_mask_base_forward.1} parent=5 // pred_check_branch
        %234 = sbr.rel (%p232) target = $region32
      $region31: #{cloud_mask_base_forward.1} parent=5 // pred_region
        // Predicated region
        $region33: #{cloud_mask_base_forward.1} parent=31 // pred_check
          %p235 = pneg %p36
        $region34: #{cloud_mask_base_forward.1} parent=31 // pred_check_branch
          %237 = sbr.rel (%p235) target = $region36
        $region35: #{cloud_mask_base_forward.1} parent=31 // pred_region
          %s238 = sand.u32 %s26, 1
          %s239 = sand.u32 %s26, 1
          %s240 = smul.addr %s239, 96
          %s241 = scalar_lea.vmem [#allocation3], %s240
          %s242 = smul.u32 4, %s16
          %s243 = smul.addr %s242, 4
          %s244 = scalar_lea.vmem %s0, %s243
          // Predicated region
          $region37: #{cloud_mask_base_forward.1} parent=35 // pred_check
            _
          $region38: #{cloud_mask_base_forward.1} parent=35 // pred_check_branch
            %246 = sbr.rel (0) target = $region40
          $region39: #{cloud_mask_base_forward.1} parent=35 // pred_region
            // Predicated region
            $region41: #{cloud_mask_base_forward.1} parent=39 // pred_check
              _
            $region42: #{cloud_mask_base_forward.1} parent=39 // pred_check_branch
              %248 = sbr.rel (0) target = $region44
            $region43: #{cloud_mask_base_forward.1} parent=39 // pred_region
              loop: start=0, step=1, limit=1
              $region45: #{cloud_mask_base_forward.1} parent=43 // loop_pre_header
                _
              $region46: #{cloud_mask_base_forward.1} parent=43 // loop_header
                %s250 = sphi 0, %s254
                %p251 = scmp.ge.s32.totalorder %s250, 1
                %s255 = sphi %s244, %s244
                %s256 = sphi %s241, %s241
              $region47: #{cloud_mask_base_forward.1} parent=43 // loop_header_branch
                %253 = sbr.rel (%p251) target = $region51
              $region48: #{cloud_mask_base_forward.1} parent=43 // loop_body
                %v257 = vld [vmem:[%s255] sm:$0xff]
                %258 = vst [vmem:[%s256] sm:$0xff] %v257
                %v259 = vld [vmem:[%s255 + $0x8] sm:$0xff]
                %260 = vst [vmem:[%s256 + $0x8] sm:$0xff] %v259
                %v261 = vld [vmem:[%s255 + $0x20] sm:$0xff]
                %262 = vst [vmem:[%s256 + $0x10] sm:$0xff] %v261
                %v263 = vld [vmem:[%s255 + $0x28] sm:$0xff]
                %264 = vst [vmem:[%s256 + $0x18] sm:$0xff] %v263
                %v265 = vld [vmem:[%s255 + $0x40] sm:$0xff]
                %266 = vst [vmem:[%s256 + $0x20] sm:$0xff] %v265
                %v267 = vld [vmem:[%s255 + $0x48] sm:$0xff]
                %268 = vst [vmem:[%s256 + $0x28] sm:$0xff] %v267
                %v269 = vld [vmem:[%s255 + $0x60] sm:$0xff]
                %270 = vst [vmem:[%s256 + $0x30] sm:$0xff] %v269
                %v271 = vld [vmem:[%s255 + $0x68] sm:$0xff]
                %272 = vst [vmem:[%s256 + $0x38] sm:$0xff] %v271
                %v273 = vld [vmem:[%s255 + $0x80] sm:$0xff]
                %274 = vst [vmem:[%s256 + $0x40] sm:$0xff] %v273
                %v275 = vld [vmem:[%s255 + $0x88] sm:$0xff]
                %276 = vst [vmem:[%s256 + $0x48] sm:$0xff] %v275
                %v277 = vld [vmem:[%s255 + $0xa0] sm:$0xff]
                %278 = vst [vmem:[%s256 + $0x50] sm:$0xff] %v277
                %v279 = vld [vmem:[%s255 + $0xa8] sm:$0xff]
                %280 = vst [vmem:[%s256 + $0x58] sm:$0xff] %v279
              $region49: #{cloud_mask_base_forward.1} parent=43 // loop_footer
                %s254 = sadd.s32 1, %s250
              $region50: #{cloud_mask_base_forward.1} parent=43 // loop_footer_branch
                %249 = sbr.rel target = $region46
              $region51: #{cloud_mask_base_forward.1} parent=43 // loop_exit
                _
            $region44: #{cloud_mask_base_forward.1} parent=39 // pred_fallthru
              _
            // Predicated region
            $region52: #{cloud_mask_base_forward.1} parent=39 // pred_check
              _
            $region53: #{cloud_mask_base_forward.1} parent=39 // pred_check_branch
              %282 = sbr.rel target = $region55
            $region54: #{cloud_mask_base_forward.1} parent=39 // pred_region
              _
            $region55: #{cloud_mask_base_forward.1} parent=39 // pred_fallthru
              _
          $region40: #{cloud_mask_base_forward.1} parent=35 // pred_fallthru
            _
          %283 = vnop
        $region36: #{cloud_mask_base_forward.1} parent=31 // pred_fallthru
          _
        // Predicated region
        $region56: #{cloud_mask_base_forward.1} parent=31 // pred_check
          %p284 = pneg %p62
        $region57: #{cloud_mask_base_forward.1} parent=31 // pred_check_branch
          %286 = sbr.rel (%p284) target = $region59
        $region58: #{cloud_mask_base_forward.1} parent=31 // pred_region
          %s287 = smul.u32 4, %s16
          %p288 = scmp.lt.s32.totalorder %s287, 7
          %s289 = scalar_select %p288, %s287, 7
          %s290 = scalar_lea.vmem %s1, %s289
          %s291 = smul.u32 4, %s16
        $region59: #{cloud_mask_base_forward.1} parent=31 // pred_fallthru
          _
      $region32: #{cloud_mask_base_forward.1} parent=5 // pred_fallthru
        _
      %p292 = scmp.le.s32.totalorder 1, %s16
      %p293 = scmp.lt.s32.totalorder %s16, 3
      %p294 = pnand %p292, %p293
      %p295 = pneg %p294
      // Predicated region
      $region60: #{cloud_mask_base_forward.1} parent=5 // pred_check
        _
      $region61: #{cloud_mask_base_forward.1} parent=5 // pred_check_branch
        %297 = sbr.rel (%p294) target = $region63
      $region62: #{cloud_mask_base_forward.1} parent=5 // pred_region
        %s298 = ssub.s32 %s16, 1
        %s299 = sand.u32 %s29, 1
        %s300 = sand.u32 %s29, 1
        %s301 = smul.addr %s300, 96
        %s302 = scalar_lea.vmem [#allocation3], %s301
        // Predicated region
        $region64: #{cloud_mask_base_forward.1} parent=62 // pred_check
          %p303 = pneg %p42
        $region65: #{cloud_mask_base_forward.1} parent=62 // pred_check_branch
          %305 = sbr.rel (%p303) target = $region67
        $region66: #{cloud_mask_base_forward.1} parent=62 // pred_region
          _
        $region67: #{cloud_mask_base_forward.1} parent=62 // pred_fallthru
          _
        %s306 = sand.u32 %s29, 1
        %s307 = sand.u32 %s29, 1
        %s308 = smul.addr %s307, 96
        %s309 = scalar_lea.vmem [#allocation3], %s308
        %p310 = pneg %p42
        %p311 = pneg %p39
        %s312 = smul.u32 4, %s21
        %p313 = scmp.lt.s32.totalorder %s312, 7
        %s314 = scalar_select %p313, %s312, 7
        %s315 = scalar_lea.vmem %s1, %s314
        %p316 = pneg %p68
        %p317 = pneg %p65
        %p318 = pneg %p89
        %p319 = pneg %p86
        %p320 = pneg %p110
        %p321 = pneg %p107
        %p322 = pneg %p131
        %p323 = pneg %p128
        %p324 = pneg %p152
        %p325 = pneg %p149
        %p326 = pneg %p178
        %p327 = pneg %p175
        %s328 = smul.u32 4, %s21
        %p329 = scmp.lt.s32.totalorder %s328, 7
        %s330 = scalar_select %p329, %s328, 7
        %s331 = scalar_lea.vmem %s6, %s330
        %p332 = pneg %p204
        %p333 = pneg %p201
        %p334 = scmp.lt.s32.totalorder %s21, 1
        %s335 = scalar_select %p334, %s21, 1
        %s336 = scalar_lea.vmem %s7, %s335
        %s337 = smul.u32 4, %s21
        %s338 = smul.u32 4, %s21
        %p339 = scmp.lt.s32.totalorder %s338, 7
        %s340 = scalar_select %p339, %s338, 7
        %s341 = scalar_lea.vmem %s1, %s340
        %s342 = smul.u32 4, %s21
        %s343 = smul.u32 4, %s21
        %p344 = scmp.lt.s32.totalorder %s343, 7
        %s345 = scalar_select %p344, %s343, 7
        %s346 = scalar_lea.vmem %s6, %s345
        %s347 = smul.u32 4, %s21
        %p348 = scmp.lt.s32.totalorder %s21, 1
        %s349 = scalar_select %p348, %s21, 1
        %s350 = scalar_lea.vmem %s7, %s349
        %v352 = vld [vmem:[%s2] sm:$0xf]
        %v353 = vld [vmem:[%s2 + $0x4] sm:$0xf]
        %v354 = vld [vmem:[%s2 + $0x8] sm:$0xf]
        %v355 = vld [vmem:[%s2 + $0xc] sm:$0xf]
        %v356 = vld [vmem:[%s302] sm:$0xff]
        %v357 = vld [vmem:[%s302 + $0x8] sm:$0xff]
        %v358 = vld [vmem:[%s302 + $0x10] sm:$0xff]
        %v359 = vld [vmem:[%s302 + $0x18] sm:$0xff]
        %v360 = vld [vmem:[%s302 + $0x20] sm:$0xff]
        %v361 = vld [vmem:[%s302 + $0x28] sm:$0xff]
        %v362 = vld [vmem:[%s302 + $0x30] sm:$0xff]
        %v363 = vld [vmem:[%s302 + $0x38] sm:$0xff]
        %v364 = vld [vmem:[%s302 + $0x40] sm:$0xff]
        %v365 = vld [vmem:[%s302 + $0x48] sm:$0xff]
        %v366 = vld [vmem:[%s302 + $0x50] sm:$0xff]
        %v367 = vld [vmem:[%s302 + $0x58] sm:$0xff]
        %v368 = vld [vmem:[%s3] sm:$0xff]
        %v369 = vld [vmem:[%s3 + $0x8] sm:$0xff]
        %v370 = vld [vmem:[%s3 + $0x10] sm:$0xff]
        %v371 = vld [vmem:[%s3 + $0x18] sm:$0xff]
        %373 = vset.pattern.permute.xlu0 0
        %374 = vperm.xlu0 %373, %v368
        %v375 = vpop.permute.xlu0 %374
        %378 = vset.pattern.permute.xlu0 0
        %379 = vperm.xlu0 %378, %v369
        %v380 = vpop.permute.xlu0 %379
        %383 = vset.pattern.permute.xlu0 0
        %384 = vperm.xlu0 %383, %v370
        %v385 = vpop.permute.xlu0 %384
        %388 = vset.pattern.permute.xlu0 0
        %389 = vperm.xlu0 %388, %v371
        %v390 = vpop.permute.xlu0 %389
        %v396 = vunpack.c.l.b16 %v352
        %v397 = vunpack.c.l.b16 %v353
        %v398 = vunpack.c.l.b16 %v354
        %v399 = vunpack.c.l.b16 %v355
        %v400 = vpack.c.b16 %v397, %v396
        %v401 = vpack.c.b16 %v399, %v398
        %v414 = vunpack.c.l.b16 %v356
        %v415 = vunpack.c.h.b16 %v356
        %v416 = vunpack.c.l.b16 %v357
        %v417 = vunpack.c.h.b16 %v357
        %v418 = vunpack.c.l.b16 %v358
        %v419 = vunpack.c.h.b16 %v358
        %v420 = vunpack.c.l.b16 %v359
        %v421 = vunpack.c.h.b16 %v359
        %v422 = vunpack.c.l.b16 %v360
        %v423 = vunpack.c.h.b16 %v360
        %v424 = vunpack.c.l.b16 %v361
        %v425 = vunpack.c.h.b16 %v361
        %v426 = vunpack.c.l.b16 %v362
        %v427 = vunpack.c.h.b16 %v362
        %v428 = vunpack.c.l.b16 %v363
        %v429 = vunpack.c.h.b16 %v363
        %v430 = vunpack.c.l.b16 %v364
        %v431 = vunpack.c.h.b16 %v364
        %v432 = vunpack.c.l.b16 %v365
        %v433 = vunpack.c.h.b16 %v365
        %v434 = vunpack.c.l.b16 %v366
        %v435 = vunpack.c.h.b16 %v366
        %v436 = vunpack.c.l.b16 %v367
        %v437 = vunpack.c.h.b16 %v367
        %v438 = vpack.c.b16 %v418, %v414
        %v439 = vpack.c.b16 %v419, %v415
        %v440 = vpack.c.b16 %v420, %v416
        %v441 = vpack.c.b16 %v421, %v417
        %v442 = vpack.c.b16 %v426, %v422
        %v443 = vpack.c.b16 %v427, %v423
        %v444 = vpack.c.b16 %v428, %v424
        %v445 = vpack.c.b16 %v429, %v425
        %v446 = vpack.c.b16 %v434, %v430
        %v447 = vpack.c.b16 %v435, %v431
        %v448 = vpack.c.b16 %v436, %v432
        %v449 = vpack.c.b16 %v437, %v433
        %vm462 = vcmask 392192
        %v464 = vsel %vm462, %v400, 0
        %v467 = vsel %vm462, %v401, 0
        %469 = vmatprep.subr.bf16.mxu0 %v439
        %470 = vmatpush1.bf16.msra.mxu0 %v438
        %471 = vmatprep.subr.bf16.mxu0 %v443
        %472 = vmatpush1.bf16.msra.mxu0 %v442
        %473 = vmatprep.subr.bf16.mxu0 %v447
        %474 = vmatpush1.bf16.msra.mxu0 %v446
        %475 = vmatprep.subr.bf16.mxu0 0
        %476 = vmatpush1.bf16.msra.mxu0 0
        %477 = vmatprep.subr.bf16.mxu0 0
        %478 = vmatpush1.bf16.msra.mxu0 0
        %479 = vmatprep.subr.bf16.mxu0 0
        %480 = vmatpush1.bf16.msra.mxu0 0
        %481 = vmatprep.subr.bf16.mxu0 0
        %482 = vmatpush1.bf16.msra.mxu0 0
        %483 = vmatprep.subr.bf16.mxu0 0
        %484 = vmatpush1.bf16.msra.mxu0 0
        %485 = vmatprep.subr.bf16.mxu0 0
        %486 = vmatpush1.bf16.msra.mxu0 0
        %487 = vmatprep.subr.bf16.mxu0 0
        %488 = vmatpush1.bf16.msra.mxu0 0
        %489 = vmatprep.subr.bf16.mxu0 0
        %490 = vmatpush1.bf16.msra.mxu0 0
        %491 = vmatprep.subr.bf16.mxu0 0
        %492 = vmatpush1.bf16.msra.mxu0 0
        %493 = vmatprep.subr.bf16.mxu0 0
        %494 = vmatpush1.bf16.msra.mxu0 0
        %495 = vmatprep.subr.bf16.mxu0 0
        %496 = vmatpush1.bf16.msra.mxu0 0
        %497 = vmatprep.subr.bf16.mxu0 0
        %498 = vmatpush1.bf16.msra.mxu0 0
        %499 = vmatprep.subr.bf16.mxu0 0
        %500 = vmatpush1.bf16.msra.mxu0 0
        %501 = vmatprep.mubr.bf16.mxu0 0
        %502 = vmatmul.mubr.bf16.gmra.mrb[0].mxu0 %v464
        %v503 = vpop.f32.mrb[0].mxu0
        %v504 = vadd.f32 %v375, %v503
        %v505 = vpop.f32.mrb[0].mxu0
        %v506 = vadd.f32 %v375, %v505
        %v507 = vpop.f32.mrb[0].mxu0
        %v508 = vadd.f32 %v380, %v507
        %v509 = vpop.f32.mrb[0].mxu0
        %v510 = vadd.f32 %v380, %v509
        %511 = vmatprep.mubr.bf16.mxu0 0
        %512 = vmatmul.mubr.bf16.gmra.mrb[0].mxu0 %v467
        %v513 = vpop.f32.mrb[0].mxu0
        %v514 = vadd.f32 %v385, %v513
        %v515 = vpop.f32.mrb[0].mxu0
        %v516 = vadd.f32 %v385, %v515
        %v517 = vpop.f32.mrb[0].mxu0
        %v518 = vadd.f32 %v390, %v517
        %v519 = vpop.f32.mrb[0].mxu0
        %v520 = vadd.f32 %v390, %v519
        %521 = vdwg.mxu0
        %522 = vmatprep.subr.bf16.mxu0 %v441
        %523 = vmatpush1.bf16.msra.mxu0 %v440
        %524 = vmatprep.subr.bf16.mxu0 %v445
        %525 = vmatpush1.bf16.msra.mxu0 %v444
        %526 = vmatprep.subr.bf16.mxu0 %v449
        %527 = vmatpush1.bf16.msra.mxu0 %v448
        %528 = vmatprep.subr.bf16.mxu0 0
        %529 = vmatpush1.bf16.msra.mxu0 0
        %530 = vmatprep.subr.bf16.mxu0 0
        %531 = vmatpush1.bf16.msra.mxu0 0
        %532 = vmatprep.subr.bf16.mxu0 0
        %533 = vmatpush1.bf16.msra.mxu0 0
        %534 = vmatprep.subr.bf16.mxu0 0
        %535 = vmatpush1.bf16.msra.mxu0 0
        %536 = vmatprep.subr.bf16.mxu0 0
        %537 = vmatpush1.bf16.msra.mxu0 0
        %538 = vmatprep.subr.bf16.mxu0 0
        %539 = vmatpush1.bf16.msra.mxu0 0
        %540 = vmatprep.subr.bf16.mxu0 0
        %541 = vmatpush1.bf16.msra.mxu0 0
        %542 = vmatprep.subr.bf16.mxu0 0
        %543 = vmatpush1.bf16.msra.mxu0 0
        %544 = vmatprep.subr.bf16.mxu0 0
        %545 = vmatpush1.bf16.msra.mxu0 0
        %546 = vmatprep.subr.bf16.mxu0 0
        %547 = vmatpush1.bf16.msra.mxu0 0
        %548 = vmatprep.subr.bf16.mxu0 0
        %549 = vmatpush1.bf16.msra.mxu0 0
        %550 = vmatprep.subr.bf16.mxu0 0
        %551 = vmatpush1.bf16.msra.mxu0 0
        %552 = vmatprep.subr.bf16.mxu0 0
        %553 = vmatpush1.bf16.msra.mxu0 0
        %554 = vmatprep.mubr.bf16.mxu0 0
        %555 = vmatmul.mubr.bf16.gmra.mrb[0].mxu0 %v464
        %v556 = vpop.f32.mrb[0].mxu0
        %v557 = vadd.f32 %v375, %v556
        %v558 = vpop.f32.mrb[0].mxu0
        %v559 = vadd.f32 %v375, %v558
        %v560 = vpop.f32.mrb[0].mxu0
        %v561 = vadd.f32 %v380, %v560
        %v562 = vpop.f32.mrb[0].mxu0
        %v563 = vadd.f32 %v380, %v562
        %564 = vmatprep.mubr.bf16.mxu0 0
        %565 = vmatmul.mubr.bf16.gmra.mrb[0].mxu0 %v467
        %v566 = vpop.f32.mrb[0].mxu0
        %v567 = vadd.f32 %v385, %v566
        %v568 = vpop.f32.mrb[0].mxu0
        %v569 = vadd.f32 %v385, %v568
        %v570 = vpop.f32.mrb[0].mxu0
        %v571 = vadd.f32 %v390, %v570
        %v572 = vpop.f32.mrb[0].mxu0
        %v573 = vadd.f32 %v390, %v572
        %574 = vdwg.mxu0
        %v575 = vmax.f32 %v504, 0.0
        %v576 = vmax.f32 %v506, 0.0
        %v577 = vmax.f32 %v557, 0.0
        %v578 = vmax.f32 %v559, 0.0
        %v579 = vmax.f32 %v508, 0.0
        %v580 = vmax.f32 %v510, 0.0
        %v581 = vmax.f32 %v561, 0.0
        %v582 = vmax.f32 %v563, 0.0
        %v583 = vmax.f32 %v514, 0.0
        %v584 = vmax.f32 %v516, 0.0
        %v585 = vmax.f32 %v567, 0.0
        %v586 = vmax.f32 %v569, 0.0
        %v587 = vmax.f32 %v518, 0.0
        %v588 = vmax.f32 %v520, 0.0
        %v589 = vmax.f32 %v571, 0.0
        %v590 = vmax.f32 %v573, 0.0
        %v591 = vld [vmem:[%s4] sm:$0xff]
        %v592 = vld [vmem:[%s4 + $0x8] sm:$0xff]
        %v593 = vld [vmem:[%s4 + $0x10] sm:$0xff]
        %v594 = vld [vmem:[%s4 + $0x18] sm:$0xff]
        %596 = vset.pattern.permute.xlu0 0
        %597 = vperm.xlu0 %596, %v591
        %v598 = vpop.permute.xlu0 %597
        %601 = vset.pattern.permute.xlu0 0
        %602 = vperm.xlu0 %601, %v592
        %v603 = vpop.permute.xlu0 %602
        %606 = vset.pattern.permute.xlu0 0
        %607 = vperm.xlu0 %606, %v593
        %v608 = vpop.permute.xlu0 %607
        %611 = vset.pattern.permute.xlu0 0
        %612 = vperm.xlu0 %611, %v594
        %v613 = vpop.permute.xlu0 %612
        %v615 = vmul.f32 %v575, %v598
        %v616 = vmul.f32 %v576, %v598
        %v617 = vmul.f32 %v577, %v598
        %v618 = vmul.f32 %v578, %v598
        %v619 = vmul.f32 %v579, %v603
        %v620 = vmul.f32 %v580, %v603
        %v621 = vmul.f32 %v581, %v603
        %v622 = vmul.f32 %v582, %v603
        %v623 = vmul.f32 %v583, %v608
        %v624 = vmul.f32 %v584, %v608
        %v625 = vmul.f32 %v585, %v608
        %v626 = vmul.f32 %v586, %v608
        %v627 = vmul.f32 %v587, %v613
        %v628 = vmul.f32 %v588, %v613
        %v629 = vmul.f32 %v589, %v613
        %v630 = vmul.f32 %v590, %v613
        %v631 = vadd.f32 %v615, %v619
        %v632 = vadd.f32 %v631, %v623
        %v633 = vadd.f32 %v632, %v627
        %v634 = vrot.slane %v633, 4
        %v635 = vadd.f32 %v633, %v634
        %v636 = vrot.slane %v635, 2
        %v637 = vadd.f32 %v635, %v636
        %v638 = vrot.slane %v637, 1
        %v639 = vadd.f32 %v637, %v638
        %v640 = vadd.f32 %v616, %v620
        %v641 = vadd.f32 %v640, %v624
        %v642 = vadd.f32 %v641, %v628
        %v643 = vrot.slane %v642, 4
        %v644 = vadd.f32 %v642, %v643
        %v645 = vrot.slane %v644, 2
        %v646 = vadd.f32 %v644, %v645
        %v647 = vrot.slane %v646, 1
        %v648 = vadd.f32 %v646, %v647
        %v649 = vadd.f32 %v617, %v621
        %v650 = vadd.f32 %v649, %v625
        %v651 = vadd.f32 %v650, %v629
        %v652 = vrot.slane %v651, 4
        %v653 = vadd.f32 %v651, %v652
        %v654 = vrot.slane %v653, 2
        %v655 = vadd.f32 %v653, %v654
        %v656 = vrot.slane %v655, 1
        %v657 = vadd.f32 %v655, %v656
        %v658 = vadd.f32 %v618, %v622
        %v659 = vadd.f32 %v658, %v626
        %v660 = vadd.f32 %v659, %v630
        %v661 = vrot.slane %v660, 4
        %v662 = vadd.f32 %v660, %v661
        %v663 = vrot.slane %v662, 2
        %v664 = vadd.f32 %v662, %v663
        %v665 = vrot.slane %v664, 1
        %v666 = vadd.f32 %v664, %v665
        %v667 = vld [vmem:[#allocation2] sm:$0x1]
        %669 = vset.pattern.permute.xlu0 0
        %670 = vperm.xlu0 %669, %v667
        %v671 = vpop.permute.xlu0 %670
        %v673 = vlaneseq
        %v674 = vshrl.u32 %v673, 7
        %v675 = vsub.s32 0, %v674
        %v676 = vrot.slane %v671, %v675
        %v677 = vadd.f32 %v639, %v676
        %v678 = vadd.f32 %v648, %v676
        %v679 = vadd.f32 %v657, %v676
        %v680 = vadd.f32 %v666, %v676
        %v681 = vsub.f32 0.0, %v677
        %v682 = vsub.f32 0.0, %v678
        %v683 = vsub.f32 0.0, %v679
        %v684 = vsub.f32 0.0, %v680
        %v685 = vmul.f32 %v681, 1.442695
        %v686 = vpow.pop %v685
        %v687 = vmul.f32 %v682, 1.442695
        %v688 = vpow.pop %v687
        %v689 = vmul.f32 %v683, 1.442695
        %v690 = vpow.pop %v689
        %v691 = vmul.f32 %v684, 1.442695
        %v692 = vpow.pop %v691
        %v693 = vadd.f32 %v686, 1.0
        %v694 = vadd.f32 %v688, 1.0
        %v695 = vadd.f32 %v690, 1.0
        %v696 = vadd.f32 %v692, 1.0
        %v697 = vrcp.pop %v693
        %v698 = vrcp.pop %v694
        %v699 = vrcp.pop %v695
        %v700 = vrcp.pop %v696
        %v705 = vcombine.low %v697, %v698
        %v706 = vcombine.low %v699, %v700
        %v708 = vunpack.c.l.s4 1966171168
        %v709 = vunpack.c.0.s8 %v708
        %v710 = vlaneseq
        %v711 = vshrl.u32 %v710, 7
        %v712 = vsub.s32 %v709, %v711
        %v713 = vrot.slane %v705, %v712
        %v715 = vunpack.c.l.s4 1966171168
        %v716 = vunpack.c.0.s8 %v715
        %v717 = vlaneseq
        %v718 = vshrl.u32 %v717, 7
        %v719 = vsub.s32 %v716, %v718
        %v720 = vrot.slane %v706, %v719
        %v721 = vcombine.low %v713, %v720
        %v723 = vunpack.c.l.s4 1966171168
        %v724 = vunpack.c.0.s8 %v723
        %v725 = vlaneseq
        %v726 = vshrl.u32 %v725, 7
        %v727 = vsub.s32 %v724, %v726
        %v728 = vrot.slane %v721, %v727
        %v730 = vlaneseq
        %vm731 = vcmp.ge.s32.totalorder %v730, 0
        %vm732 = vcmp.lt.s32.totalorder %v730, 512
        %vm733 = vmand %vm731, %vm732
        %734 = vst.msk [vmem:[%s346] sm:$0xf] %vm733, %v728
        %v735 = vld [vmem:[%s341] sm:$0xf]
        %v736 = vmax.f32 %v677, 0.0
        %v737 = vmax.f32 %v678, 0.0
        %v738 = vmax.f32 %v679, 0.0
        %v739 = vmax.f32 %v680, 0.0
        %v741 = vlaneseq
        %v742 = vshrl.u32 %v741, 7
        %v743 = vsub.s32 0, %v742
        %v744 = vrot.slane %v735, %v743
        %v745 = vlaneseq
        %v746 = vshrl.u32 %v745, 7
        %v747 = vsub.s32 1, %v746
        %v748 = vrot.slane %v735, %v747
        %v749 = vlaneseq
        %v750 = vshrl.u32 %v749, 7
        %v751 = vsub.s32 2, %v750
        %v752 = vrot.slane %v735, %v751
        %v753 = vlaneseq
        %v754 = vshrl.u32 %v753, 7
        %v755 = vsub.s32 3, %v754
        %v756 = vrot.slane %v735, %v755
        %v761 = vmul.f32 %v677, %v744
        %v762 = vmul.f32 %v678, %v748
        %v763 = vmul.f32 %v679, %v752
        %v764 = vmul.f32 %v680, %v756
        %v765 = vsub.f32 %v736, %v761
        %v766 = vsub.f32 %v737, %v762
        %v767 = vsub.f32 %v738, %v763
        %v768 = vsub.f32 %v739, %v764
        %v769 = vand.u32 2147483647, %v677
        %v770 = vand.u32 2147483647, %v678
        %v771 = vand.u32 2147483647, %v679
        %v772 = vand.u32 2147483647, %v680
        %v773 = vsub.f32 0.0, %v769
        %v774 = vsub.f32 0.0, %v770
        %v775 = vsub.f32 0.0, %v771
        %v776 = vsub.f32 0.0, %v772
        %v777 = vmul.f32 %v773, 1.442695
        %v778 = vpow.pop %v777
        %v779 = vmul.f32 %v774, 1.442695
        %v780 = vpow.pop %v779
        %v781 = vmul.f32 %v775, 1.442695
        %v782 = vpow.pop %v781
        %v783 = vmul.f32 %v776, 1.442695
        %v784 = vpow.pop %v783
        %v785 = vadd.f32 %v778, 1.0
        %v786 = vadd.f32 %v780, 1.0
        %v787 = vadd.f32 %v782, 1.0
        %v788 = vadd.f32 %v784, 1.0
        %v789 = vlog2.pop %v785
        %v790 = vmul.f32 %v789, 0.6931472
        %v791 = vlog2.pop %v786
        %v792 = vmul.f32 %v791, 0.6931472
        %v793 = vlog2.pop %v787
        %v794 = vmul.f32 %v793, 0.6931472
        %v795 = vlog2.pop %v788
        %v796 = vmul.f32 %v795, 0.6931472
        %v797 = vadd.f32 %v765, %v790
        %v798 = vadd.f32 %v766, %v792
        %v799 = vadd.f32 %v767, %v794
        %v800 = vadd.f32 %v768, %v796
        %v801 = vlaneseq
        %v802 = vand.u32 %v801, 127
        %v803 = vadd.s32 %v802, 128
        %v804 = vadd.s32 %v802, 256
        %v805 = vadd.s32 %v802, 384
        %s806 = smul.u32 %s21, 512
        %v807 = vstv %s806
        %v808 = vadd.s32 %v802, %v807
        %v809 = vadd.s32 %v803, %v807
        %v810 = vadd.s32 %v804, %v807
        %v811 = vadd.s32 %v805, %v807
        %vm812 = vcmp.lt.s32.totalorder %v808, 768
        %vm813 = vcmp.lt.s32.totalorder %v809, 768
        %vm814 = vcmp.lt.s32.totalorder %v810, 768
        %vm815 = vcmp.lt.s32.totalorder %v811, 768
        %v816 = vsel %vm812, %v797, 0.0
        %v817 = vsel %vm813, %v798, 0.0
        %v818 = vsel %vm814, %v799, 0.0
        %v819 = vsel %vm815, %v800, 0.0
        %vm820 = vcmask 1040384
        %v821 = vsel %vm820, %v816, 0.0
        %v822 = vsel %vm820, %v817, 0.0
        %v823 = vadd.f32 %v821, %v822
        %v824 = vsel %vm820, %v818, 0.0
        %v825 = vadd.f32 %v823, %v824
        %v826 = vsel %vm820, %v819, 0.0
        %v827 = vadd.f32 %v825, %v826
        %828 = vadd.xlane.f32.xlu0 %v827
        %v829 = vpop.xlane.xlu0 %828
        %v830 = vrot.slane %v829, 4
        %v831 = vadd.f32 %v829, %v830
        %v832 = vrot.slane %v831, 2
        %v833 = vadd.f32 %v831, %v832
        %v834 = vrot.slane %v833, 1
        %v835 = vadd.f32 %v833, %v834
        %s836 = vtos %v835
        %v837 = vstv %s836
        %838 = vst [vmem:[%s350] sm:$0x1] %v837
        %s839 = smul.u32 4, %s21
        %p840 = scmp.lt.s32.totalorder %s839, 7
        %s841 = scalar_select %p840, %s839, 7
        %s842 = scalar_lea.vmem %s6, %s841
        %p843 = scmp.lt.s32.totalorder %s21, 1
        %s844 = scalar_select %p843, %s21, 1
        %s845 = scalar_lea.vmem %s7, %s844
        // Predicated region
        $region68: #{cloud_mask_base_forward.1} parent=62 // pred_check
          %p846 = pneg %p175
        $region69: #{cloud_mask_base_forward.1} parent=62 // pred_check_branch
          %848 = sbr.rel (%p846) target = $region71
        $region70: #{cloud_mask_base_forward.1} parent=62 // pred_region
          %s849 = smul.u32 4, %s21
        $region71: #{cloud_mask_base_forward.1} parent=62 // pred_fallthru
          _
        // Predicated region
        $region72: #{cloud_mask_base_forward.1} parent=62 // pred_check
          %p850 = pneg %p201
        $region73: #{cloud_mask_base_forward.1} parent=62 // pred_check_branch
          %852 = sbr.rel (%p850) target = $region75
        $region74: #{cloud_mask_base_forward.1} parent=62 // pred_region
          _
        $region75: #{cloud_mask_base_forward.1} parent=62 // pred_fallthru
          _
      $region63: #{cloud_mask_base_forward.1} parent=5 // pred_fallthru
        _
      %p853 = scmp.le.s32.totalorder 2, %s16
      // Predicated region
      $region76: #{cloud_mask_base_forward.1} parent=5 // pred_check
        %p854 = pneg %p853
      $region77: #{cloud_mask_base_forward.1} parent=5 // pred_check_branch
        %856 = sbr.rel (%p854) target = $region79
      $region78: #{cloud_mask_base_forward.1} parent=5 // pred_region
        %s857 = ssub.s32 %s16, 2
        // Predicated region
        $region80: #{cloud_mask_base_forward.1} parent=78 // pred_check
          %p858 = pneg %p181
        $region81: #{cloud_mask_base_forward.1} parent=78 // pred_check_branch
          %860 = sbr.rel (%p858) target = $region83
        $region82: #{cloud_mask_base_forward.1} parent=78 // pred_region
          %s861 = smul.u32 4, %s22
          %p862 = scmp.lt.s32.totalorder %s861, 7
          %s863 = scalar_select %p862, %s861, 7
          %s864 = scalar_lea.vmem %s6, %s863
        $region83: #{cloud_mask_base_forward.1} parent=78 // pred_fallthru
          _
        // Predicated region
        $region84: #{cloud_mask_base_forward.1} parent=78 // pred_check
          %p865 = pneg %p207
        $region85: #{cloud_mask_base_forward.1} parent=78 // pred_check_branch
          %867 = sbr.rel (%p865) target = $region87
        $region86: #{cloud_mask_base_forward.1} parent=78 // pred_region
          %p868 = scmp.lt.s32.totalorder %s22, 1
          %s869 = scalar_select %p868, %s22, 1
          %s870 = scalar_lea.vmem %s7, %s869
        $region87: #{cloud_mask_base_forward.1} parent=78 // pred_fallthru
          _
      $region79: #{cloud_mask_base_forward.1} parent=5 // pred_fallthru
        _
    $region6: #{cloud_mask_base_forward.1} parent=1 // loop_footer
      %s20 = sadd.s32 1, %s16
    $region7: #{cloud_mask_base_forward.1} parent=1 // loop_footer_branch
      %15 = sbr.rel target = $region3
    $region8: #{cloud_mask_base_forward.1} parent=1 // loop_exit
      _

</llo_original>
